<compile_context>
chip_gen: v6e
topology: v6e:2x2x1
jax: 0.10.0
libtpu: 0.0.40
codegen_flags: <defaults>
</compile_context>

<pallas_src>
import functools
import math

import jax
import jax.numpy as jnp
from jax import lax
from jax.experimental import pallas as pl
from jax.experimental.pallas import tpu as pltpu

_LOG2E = 1.4426950408889634  # log2(e) = 1/ln(2)


def _lambda_loss_kernel(yp_r_ref, yp_c_ref, yt_r_ref, yt_c_ref, *out_refs,
                        sigma, log2_eps, kk, apply_k_mask, need_count,
                        ti, tj, compute_dtype):
    """One (batch, row-tile, col-tile) step of the pairwise LambdaLoss sum.

    yp_r_ref / yt_r_ref : (1, ti, 1)     row slice (pred-sorted order)
    yp_c_ref / yt_c_ref : (1, 1, tj)     column slice
    out_refs[0]         : (1, 1, 8, tj)  partial-sum accumulator (resident in j)
    out_refs[1]         : (1, 1, 8, tj)  pair-count accumulator ('mean' only)
    """
    i = pl.program_id(1)
    j = pl.program_id(2)

    sum_ref = out_refs[0]

    @pl.when(j == 0)
    def _init():
        sum_ref[...] = jnp.zeros_like(sum_ref)
        if need_count:
            out_refs[1][...] = jnp.zeros_like(out_refs[1])

    yp_r = yp_r_ref[0]                      # (ti, 1)
    yp_c = yp_c_ref[0]                      # (1, tj)
    yt_r = yt_r_ref[0]
    yt_c = yt_c_ref[0]

    # padded_pairs_mask: finite & positive label difference.  Padded positions
    # carry -inf labels, so every pair touching padding is rejected here.
    t_diffs = yt_r - yt_c                   # (ti, tj)
    mask = jnp.isfinite(t_diffs) & (t_diffs > 0.0)

    if apply_k_mask:                        # static flag; only when k < slate
        row_idx = i * ti + lax.broadcasted_iota(jnp.int32, (ti, tj), 0)
        col_idx = j * tj + lax.broadcasted_iota(jnp.int32, (ti, tj), 1)
        mask = mask & (row_idx < kk) & (col_idx < kk)

    # losses = log2(clamp(sigmoid(sigma*(p_r - p_c)), eps))
    #        = max(-log2(e) * log(1 + exp(-sigma*(p_r - p_c))), log2(eps))
    # (2 EUP pushes per element; the eps clamp is folded into the max; the
    #  original +/-1e8 clamp on score diffs is a no-op for finite f32 inputs.)
    z = yp_c - yp_r                         # == -scores_diffs
    if sigma != 1.0:
        z = sigma * z
    if compute_dtype != jnp.float32:
        z = z.astype(compute_dtype)         # optional bf16 transcendental path
    softplus = jnp.log(1.0 + jnp.exp(z)).astype(jnp.float32)
    losses = jnp.maximum(-_LOG2E * softplus, log2_eps)

    contrib = jnp.where(mask, losses, 0.0)
    # Free reshape onto the native (8, lane) tiling: the sublane split keeps the
    # last two dims layout-compatible, so the reduce is pure VALU vreg adds.
    # The single cross-lane reduce is deferred to the wrapper.
    sum_ref[0, 0] += contrib.reshape(ti // 8, 8, tj).sum(axis=0)

    if need_count:                          # only on the 'mean' path
        cnt = jnp.where(mask, 1.0, 0.0)
        out_refs[1][0, 0] += cnt.reshape(ti // 8, 8, tj).sum(axis=0)


def _round_up(x, m):
    return ((x + m - 1) // m) * m


def _pick_tile(candidates, cap, total):
    for t in candidates:
        if t <= cap and total % t == 0:
            return t
    return candidates[-1]


def lambda_loss_ltr(y_pred, y_true, eps=1e-10, weighing_scheme=None, k=None,
                    sigma=1.0, mu=10.0, reduction='sum',
                    reduction_log='binary', use_bf16_transcendentals=False):
    if weighing_scheme is not None:
        # TODO(synk): non-default weighing schemes (ndcgLoss1/2/2PP, lambdaRank,
        # rankNet*) need the G/D weight tensors; only the default
        # (weights == 1.0) path is implemented in the kernel.
        raise NotImplementedError("only weighing_scheme=None is implemented")
    if reduction_log not in ('binary', 'natural'):
        raise ValueError('Reduction logarithm base can be either natural or binary')
    if reduction not in ('sum', 'mean'):
        raise ValueError('Reduction method can be either sum or mean')
    del mu  # only used by the NDCGLoss2++ weighing scheme

    y_pred = jnp.asarray(y_pred, jnp.float32)
    y_true = jnp.asarray(y_true, jnp.float32)
    B, S = y_pred.shape
    kk = S if k is None else min(int(k), S)
    if kk <= 0:  # empty pair mask: torch gives sum == 0, mean == nan
        return jnp.float32(0.0) if reduction == 'sum' else jnp.float32(jnp.nan)

    # Glue: descending sort of predictions + gather of labels by that order.
    order = jnp.argsort(-y_pred, axis=-1)
    yp = jnp.take_along_axis(y_pred, order, axis=-1)
    yt = jnp.take_along_axis(y_true, order, axis=-1)

    # Lane-dense padding of the position axis; padded labels are -inf so every
    # padded pair fails the isfinite/(>0) mask inside the kernel.
    s_pad = _round_up(S, 128)
    if s_pad != S:
        yp = jnp.pad(yp, ((0, 0), (0, s_pad - S)), constant_values=0.0)
        yt = jnp.pad(yt, ((0, 0), (0, s_pad - S)), constant_values=-jnp.inf)

    # k-truncation bounds the grid: only tiles whose start is < k are run.
    needed = kk
    apply_k_mask = kk < S

    ti = _pick_tile((256, 128, 64, 32, 16, 8),
                    max(8, _round_up(needed, 8)), s_pad)
    tj = _pick_tile((1024, 512, 256, 128),
                    max(128, _round_up(needed, 128)), s_pad)
    n_i = -(-needed // ti)
    n_j = -(-needed // tj)

    need_count = (reduction == 'mean')

    kernel = functools.partial(
        _lambda_loss_kernel,
        sigma=float(sigma),
        log2_eps=float(math.log2(eps)),
        kk=int(kk),
        apply_k_mask=apply_k_mask,
        need_count=need_count,
        ti=ti, tj=tj,
        compute_dtype=jnp.bfloat16 if use_bf16_transcendentals else jnp.float32)

    in_specs = [
        pl.BlockSpec((1, ti, 1), lambda b, i, j: (b, i, 0)),   # y_pred rows
        pl.BlockSpec((1, 1, tj), lambda b, i, j: (b, 0, j)),   # y_pred cols
        pl.BlockSpec((1, ti, 1), lambda b, i, j: (b, i, 0)),   # y_true rows
        pl.BlockSpec((1, 1, tj), lambda b, i, j: (b, 0, j)),   # y_true cols
    ]
    # Lane-dense accumulators, one block per (batch, row-tile); resident only
    # across the innermost (column) grid axis.
    out_shape = [jax.ShapeDtypeStruct((B, n_i, 8, tj), jnp.float32)]
    out_specs = [pl.BlockSpec((1, 1, 8, tj), lambda b, i, j: (b, i, 0, 0))]
    if need_count:
        out_shape.append(jax.ShapeDtypeStruct((B, n_i, 8, tj), jnp.float32))
        out_specs.append(pl.BlockSpec((1, 1, 8, tj), lambda b, i, j: (b, i, 0, 0)))

    outs = pl.pallas_call(
        kernel,
        out_shape=tuple(out_shape),
        grid=(B, n_i, n_j),
        in_specs=in_specs,
        out_specs=tuple(out_specs),
        compiler_params=pltpu.CompilerParams(
            dimension_semantics=("parallel", "parallel", "arbitrary"),
            vmem_limit_bytes=64 * 1024 * 1024),
    )(yp.reshape(B, s_pad, 1), yp.reshape(B, 1, s_pad),
      yt.reshape(B, s_pad, 1), yt.reshape(B, 1, s_pad))

    loss = -jnp.sum(outs[0])
    if reduction_log == 'natural':
        loss = loss * jnp.float32(math.log(2.0))   # log(p) = log2(p) * ln(2)
    if reduction == 'mean':
        loss = loss / jnp.sum(outs[1])
    return loss


def _reference_loss(y_pred, y_true, eps=1e-10, k=None, sigma=1.0,
                    reduction='sum', reduction_log='binary'):
    """Pure-JAX reference mirroring the PyTorch default forward."""
    B, S = y_pred.shape
    order = jnp.argsort(-y_pred, axis=-1)
    yp = jnp.take_along_axis(y_pred, order, axis=-1)
    yt = jnp.take_along_axis(y_true, order, axis=-1)
    t_diffs = yt[:, :, None] - yt[:, None, :]
    mask = jnp.isfinite(t_diffs) & (t_diffs > 0)
    kk = S if k is None else min(int(k), S)
    idx = jnp.arange(S)
    kmask = (idx[:, None] < kk) & (idx[None, :] < kk)
    mask = mask & kmask[None]
    s_diffs = jnp.clip(yp[:, :, None] - yp[:, None, :], -1e8, 1e8)
    probas = jnp.clip(jax.nn.sigmoid(sigma * s_diffs), eps, None)
    if reduction_log == 'binary':
        losses = jnp.log2(probas)
    else:
        losses = jnp.log(probas)
    masked = jnp.where(mask, losses, 0.0)
    if reduction == 'sum':
        return -jnp.sum(masked)
    return -jnp.sum(masked) / jnp.sum(mask).astype(jnp.float32)


if __name__ == "__main__":
    key = jax.random.PRNGKey(0)
    k1, k2 = jax.random.split(key)

    # default path: reduction='sum', reduction_log='binary', k=None
    batch, slate = 2, 8
    y_pred = jax.random.normal(k1, (batch, slate), dtype=jnp.float32)
    y_true = jax.random.randint(k2, (batch, slate), 0, 4).astype(jnp.float32)
    loss = jax.block_until_ready(lambda_loss_ltr(y_pred, y_true))
    ref = _reference_loss(y_pred, y_true)
    assert jnp.allclose(loss, ref, rtol=1e-5, atol=1e-5), (loss, ref)

    # truncated-k / mean / natural-log path (exercises k-mask + count output)
    k3, k4 = jax.random.split(k2)
    y_pred2 = jax.random.normal(k3, (3, 40), dtype=jnp.float32)
    y_true2 = jax.random.randint(k4, (3, 40), 0, 5).astype(jnp.float32)
    loss2 = jax.block_until_ready(
        lambda_loss_ltr(y_pred2, y_true2, k=5, reduction='mean',
                        reduction_log='natural'))
    ref2 = _reference_loss(y_pred2, y_true2, k=5, reduction='mean',
                           reduction_log='natural')
    assert jnp.allclose(loss2, ref2, rtol=1e-5, atol=1e-5), (loss2, ref2)

    print("KERNEL_OK")
</pallas_src>

<mosaic_0001>
module attributes {stable_mosaic.version = 11 : i64} {
  func.func @_lambda_loss_kernel(%arg0: i32, %arg1: i32, %arg2: i32, %arg3: memref<1x8x1xf32, #tpu.memory_space<vmem>>, %arg4: memref<1x1x128xf32, #tpu.memory_space<vmem>>, %arg5: memref<1x8x1xf32, #tpu.memory_space<vmem>>, %arg6: memref<1x1x128xf32, #tpu.memory_space<vmem>>, %arg7: memref<1x1x8x128xf32, #tpu.memory_space<vmem>>) attributes {dimension_semantics = [#tpu.dimension_semantics<parallel>, #tpu.dimension_semantics<parallel>, #tpu.dimension_semantics<arbitrary>], iteration_bounds = array<i64: 2, 1, 1>, scalar_prefetch = 0 : i64, scratch_operands = 0 : i64, tpu.core_type = #tpu.core_type<tc>, window_params = [{transform_indices = @transform_0, window_bounds = array<i64: 1, 8, 1>}, {transform_indices = @transform_1, window_bounds = array<i64: 1, 1, 128>}, {transform_indices = @transform_2, window_bounds = array<i64: 1, 8, 1>}, {transform_indices = @transform_3, window_bounds = array<i64: 1, 1, 128>}, {transform_indices = @transform_4, window_bounds = array<i64: 1, 1, 8, 128>}]} {
    %c0_i32 = arith.constant 0 : i32
    %0 = arith.cmpi eq, %arg2, %c0_i32 : i32
    %1 = arith.extui %0 : i1 to i32
    %c0_i32_0 = arith.constant 0 : i32
    %2 = arith.cmpi ne, %1, %c0_i32_0 : i32
    scf.if %2 {
      %cst_26 = arith.constant 0.000000e+00 : f32
      %40 = vector.broadcast %cst_26 : f32 to vector<1x1x8x128xf32>
      %c0_27 = arith.constant 0 : index
      %c0_28 = arith.constant 0 : index
      %c0_29 = arith.constant 0 : index
      %c0_30 = arith.constant 0 : index
      %41 = vector.load %arg7[%c0_27, %c0_28, %c0_29, %c0_30] : memref<1x1x8x128xf32, #tpu.memory_space<vmem>>, vector<1x1x8x128xf32>
      tpu.vector_store %arg7[%c0_27, %c0_28, %c0_29, %c0_30], %40 {strides = array<i32>} : memref<1x1x8x128xf32, #tpu.memory_space<vmem>>, vector<1x1x8x128xf32>,
    } else {
    }
    %c0 = arith.constant 0 : index
    %c0_1 = arith.constant 0 : index
    %c0_2 = arith.constant 0 : index
    %3 = vector.load %arg3[%c0, %c0_1, %c0_2] : memref<1x8x1xf32, #tpu.memory_space<vmem>>, vector<1x8x1xf32>
    %4 = vector.shape_cast %3 : vector<1x8x1xf32> to vector<8x1xf32>
    %c0_3 = arith.constant 0 : index
    %c0_4 = arith.constant 0 : index
    %c0_5 = arith.constant 0 : index
    %5 = vector.load %arg4[%c0_3, %c0_4, %c0_5] : memref<1x1x128xf32, #tpu.memory_space<vmem>>, vector<1x1x128xf32>
    %6 = vector.shape_cast %5 : vector<1x1x128xf32> to vector<1x128xf32>
    %c0_6 = arith.constant 0 : index
    %c0_7 = arith.constant 0 : index
    %c0_8 = arith.constant 0 : index
    %7 = vector.load %arg5[%c0_6, %c0_7, %c0_8] : memref<1x8x1xf32, #tpu.memory_space<vmem>>, vector<1x8x1xf32>
    %8 = vector.shape_cast %7 : vector<1x8x1xf32> to vector<8x1xf32>
    %c0_9 = arith.constant 0 : index
    %c0_10 = arith.constant 0 : index
    %c0_11 = arith.constant 0 : index
    %9 = vector.load %arg6[%c0_9, %c0_10, %c0_11] : memref<1x1x128xf32, #tpu.memory_space<vmem>>, vector<1x1x128xf32>
    %10 = vector.shape_cast %9 : vector<1x1x128xf32> to vector<1x128xf32>
    %11 = vector.broadcast %8 : vector<8x1xf32> to vector<8x128xf32>
    %12 = vector.broadcast %10 : vector<1x128xf32> to vector<8x128xf32>
    %13 = arith.subf %11, %12 : vector<8x128xf32>
    %14 = tpu.weird %13 : vector<8x128xf32> -> vector<8x128xi1>
    %cst = arith.constant dense<true> : vector<8x128xi1>
    %15 = arith.xori %14, %cst : vector<8x128xi1>
    %cst_12 = arith.constant 0.000000e+00 : f32
    %16 = vector.broadcast %cst_12 : f32 to vector<8x128xf32>
    %17 = arith.cmpf ogt, %13, %16 : vector<8x128xf32>
    %18 = arith.andi %15, %17 : vector<8x128xi1>
    %19 = vector.broadcast %6 : vector<1x128xf32> to vector<8x128xf32>
    %20 = vector.broadcast %4 : vector<8x1xf32> to vector<8x128xf32>
    %21 = arith.subf %19, %20 : vector<8x128xf32>
    %22 = math.exp %21 : vector<8x128xf32>
    %cst_13 = arith.constant 1.000000e+00 : f32
    %23 = vector.broadcast %cst_13 : f32 to vector<8x128xf32>
    %24 = arith.addf %23, %22 : vector<8x128xf32>
    %25 = math.log %24 : vector<8x128xf32>
    %cst_14 = arith.constant -1.44269502 : f32
    %26 = vector.broadcast %cst_14 : f32 to vector<8x128xf32>
    %27 = arith.mulf %26, %25 : vector<8x128xf32>
    %cst_15 = arith.constant -33.2192802 : f32
    %28 = vector.broadcast %cst_15 : f32 to vector<8x128xf32>
    %29 = arith.maximumf %27, %28 : vector<8x128xf32>
    %cst_16 = arith.constant 0.000000e+00 : f32
    %30 = vector.broadcast %cst_16 : f32 to vector<8x128xf32>
    %31 = arith.select %18, %29, %30 : vector<8x128xi1>, vector<8x128xf32>
    %c0_17 = arith.constant 0 : index
    %c0_18 = arith.constant 0 : index
    %c0_19 = arith.constant 0 : index
    %c0_20 = arith.constant 0 : index
    %32 = vector.load %arg7[%c0_17, %c0_18, %c0_19, %c0_20] : memref<1x1x8x128xf32, #tpu.memory_space<vmem>>, vector<1x1x8x128xf32>
    %33 = vector.shape_cast %32 : vector<1x1x8x128xf32> to vector<8x128xf32>
    %34 = vector.shape_cast %31 : vector<8x128xf32> to vector<1x8x128xf32>
    %cst_21 = arith.constant dense<0.000000e+00> : vector<8x128xf32>
    %35 = vector.multi_reduction <add>, %34, %cst_21 [0] : vector<1x8x128xf32> to vector<8x128xf32>
    %36 = arith.addf %33, %35 : vector<8x128xf32>
    %c0_22 = arith.constant 0 : index
    %c0_23 = arith.constant 0 : index
    %c0_24 = arith.constant 0 : index
    %c0_25 = arith.constant 0 : index
    %37 = vector.load %arg7[%c0_22, %c0_23, %c0_24, %c0_25] : memref<1x1x8x128xf32, #tpu.memory_space<vmem>>, vector<1x1x8x128xf32>
    %38 = vector.shape_cast %37 : vector<1x1x8x128xf32> to vector<8x128xf32>
    %39 = vector.shape_cast %36 : vector<8x128xf32> to vector<1x1x8x128xf32>
    tpu.vector_store %arg7[%c0_22, %c0_23, %c0_24, %c0_25], %39 {strides = array<i32>} : memref<1x1x8x128xf32, #tpu.memory_space<vmem>>, vector<1x1x8x128xf32>,
    return
  }
  func.func @transform_0(%arg0: i32, %arg1: i32, %arg2: i32) -> (i32, i32, i32) {
    %c0_i32 = arith.constant 0 : i32
    %c0_i32_0 = arith.constant 0 : i32
    return %arg0, %arg1, %c0_i32 : i32, i32, i32
  }
  func.func @transform_1(%arg0: i32, %arg1: i32, %arg2: i32) -> (i32, i32, i32) {
    %c0_i32 = arith.constant 0 : i32
    %c0_i32_0 = arith.constant 0 : i32
    return %arg0, %c0_i32, %arg2 : i32, i32, i32
  }
  func.func @transform_2(%arg0: i32, %arg1: i32, %arg2: i32) -> (i32, i32, i32) {
    %c0_i32 = arith.constant 0 : i32
    %c0_i32_0 = arith.constant 0 : i32
    return %arg0, %arg1, %c0_i32 : i32, i32, i32
  }
  func.func @transform_3(%arg0: i32, %arg1: i32, %arg2: i32) -> (i32, i32, i32) {
    %c0_i32 = arith.constant 0 : i32
    %c0_i32_0 = arith.constant 0 : i32
    return %arg0, %c0_i32, %arg2 : i32, i32, i32
  }
  func.func @transform_4(%arg0: i32, %arg1: i32, %arg2: i32) -> (i32, i32, i32, i32) {
    %c0_i32 = arith.constant 0 : i32
    %c0_i32_0 = arith.constant 0 : i32
    %c0_i32_1 = arith.constant 0 : i32
    return %arg0, %arg1, %c0_i32, %c0_i32_0 : i32, i32, i32, i32
  }
}

</mosaic_0001>

<llo_original>
// kernel: tpu_custom_call.1
$region0: #{tpu_custom_call.1}
  #allocation0 [shape = 'u32[]', space=smem, size = 0x4, offset = 0x4, fixed_abs, tag = 'smem constant byte address 0x4 - core index']
  #allocation1 [shape = 'u32[144,128]{1,0:T(1,128)}', space=vmem, size = 0x12000, scoped, tag = 'internal scratch']
  %s0 = inlined_call_operand.vmem [shape: f32[2,128,1], index: 0, kind: input, shape index: {}]
  %s1 = inlined_call_operand.vmem [shape: f32[2,1,128], index: 1, kind: input, shape index: {}]
  %s2 = inlined_call_operand.vmem [shape: f32[2,128,1], index: 2, kind: input, shape index: {}]
  %s3 = inlined_call_operand.vmem [shape: f32[2,1,128], index: 3, kind: input, shape index: {}]
  %s4 = inlined_call_operand.hbm [shape: f32[2,1,8,128], index: 4, kind: output, shape index: {}]
  %s5 = sld [smem:[#allocation0]]
  $region53: #{tpu_custom_call.1} parent=0
    _
  %s7 = ssub.s32 1, %s5
  %s8 = scalar_select 0, %s7, %s5
  $region1: #{tpu_custom_call.1} parent=0
    #allocation2 [shape = 'u8[8192]{0}', space=vmem, size = 0x2000, scoped, tag = 'output window, operand 0']
    #allocation3 [shape = 's32[2]{0}', space=sflag, size = 0x8, scoped, tag = 'scoped memory for tpu_custom_call.1']
    %9 = vsyncpa [#allocation3], 0
    %s10 = scalar_lea.sflag [#allocation3], 1
    %11 = vsyncpa %s10, 0
    loop: start=0, step=1, limit=4
    $region2: #{tpu_custom_call.1} parent=1 // loop_pre_header
      _
    $region3: #{tpu_custom_call.1} parent=1 // loop_header
      %s13 = sphi 0, %s17
      %p14 = scmp.ge.s32.totalorder %s13, 4
      %s20 = sphi 0, %s39
      %s21 = sphi 0, %s35
      %s22 = sphi 0, %s31
      %s23 = sphi 0, %s20
      %s24 = sphi 0, %s21
      %s25 = sphi 0, %s22
      %s26 = sphi 0, %s23
      %s27 = sphi 0, %s24
      %s28 = sphi 0, %s25
      %s44 = sphi 0, %s46
      %s47 = sphi 0, %s44
      %s48 = sphi 0, %s47
      %s64 = sphi 0, %s48
      %s72 = sphi 0, %s74
      %s75 = sphi 0, %s72
      %s76 = sphi 0, %s75
      %s92 = sphi 0, %s76
      %s100 = sphi 0, %s102
      %s103 = sphi 0, %s100
      %s104 = sphi 0, %s103
      %s120 = sphi 0, %s104
      %s128 = sphi 0, %s130
      %s131 = sphi 0, %s128
      %s132 = sphi 0, %s131
      %s148 = sphi 0, %s132
      %s156 = sphi 0, %s158
      %s159 = sphi 0, %s156
      %s160 = sphi 0, %s159
      %s176 = sphi 0, %s160
    $region4: #{tpu_custom_call.1} parent=1 // loop_header_branch
      %16 = sbr.rel (%p14) target = $region8
    $region5: #{tpu_custom_call.1} parent=1 // loop_body
      %s18 = ssub.s32 %s13, 1
      %s19 = ssub.s32 %s13, 2
      %s29 = sadd.s32 1, %s22
      %p30 = scmp.ge.s32.totalorder %s29, 1
      %s31 = scalar_select %p30, 0, %s29
      %s32 = sadd.s32 1, %s21
      %s33 = scalar_select %p30, %s32, %s21
      %p34 = scmp.ge.s32.totalorder %s33, 1
      %s35 = scalar_select %p34, 0, %s33
      %s36 = sadd.s32 1, %s20
      %s37 = scalar_select %p34, %s36, %s20
      %p38 = scmp.ge.s32.totalorder %s37, 2
      %s39 = scalar_select %p38, 0, %s37
      %s40 = ssub.s32 %s20, %s39
      %s41 = ssub.s32 %s21, %s35
      %s42 = sor.u32 %s40, %s41
      %p43 = scmp.eq.s32.totalorder %s42, 0
      %s45 = sadd.s32 %s44, 1
      %s46 = scalar_select %p43, %s44, %s45
      %p49 = pneg %p43
      %p50 = scmp.eq.s32.totalorder %s13, 1
      %p51 = por %p49, %p50
      %p52 = scmp.ne.s32.totalorder %s44, %s47
      %p53 = scmp.eq.s32.totalorder %s13, 0
      %p54 = por %p52, %p53
      %p55 = scmp.ne.s32.totalorder %s44, %s47
      %p56 = scmp.eq.s32.totalorder %s18, 1
      %p57 = por %p55, %p56
      %p58 = scmp.ne.s32.totalorder %s47, %s48
      %p59 = scmp.eq.s32.totalorder %s18, 0
      %p60 = por %p58, %p59
      %p61 = scmp.ne.s32.totalorder %s47, %s48
      %p62 = scmp.eq.s32.totalorder %s19, 1
      %p63 = por %p61, %p62
      %p65 = scmp.ne.s32.totalorder %s48, %s64
      %p66 = scmp.eq.s32.totalorder %s19, 0
      %p67 = por %p65, %p66
      %s68 = ssub.s32 %s20, %s39
      %s69 = ssub.s32 %s22, %s31
      %s70 = sor.u32 %s68, %s69
      %p71 = scmp.eq.s32.totalorder %s70, 0
      %s73 = sadd.s32 %s72, 1
      %s74 = scalar_select %p71, %s72, %s73
      %p77 = pneg %p71
      %p78 = scmp.eq.s32.totalorder %s13, 1
      %p79 = por %p77, %p78
      %p80 = scmp.ne.s32.totalorder %s72, %s75
      %p81 = scmp.eq.s32.totalorder %s13, 0
      %p82 = por %p80, %p81
      %p83 = scmp.ne.s32.totalorder %s72, %s75
      %p84 = scmp.eq.s32.totalorder %s18, 1
      %p85 = por %p83, %p84
      %p86 = scmp.ne.s32.totalorder %s75, %s76
      %p87 = scmp.eq.s32.totalorder %s18, 0
      %p88 = por %p86, %p87
      %p89 = scmp.ne.s32.totalorder %s75, %s76
      %p90 = scmp.eq.s32.totalorder %s19, 1
      %p91 = por %p89, %p90
      %p93 = scmp.ne.s32.totalorder %s76, %s92
      %p94 = scmp.eq.s32.totalorder %s19, 0
      %p95 = por %p93, %p94
      %s96 = ssub.s32 %s20, %s39
      %s97 = ssub.s32 %s21, %s35
      %s98 = sor.u32 %s96, %s97
      %p99 = scmp.eq.s32.totalorder %s98, 0
      %s101 = sadd.s32 %s100, 1
      %s102 = scalar_select %p99, %s100, %s101
      %p105 = pneg %p99
      %p106 = scmp.eq.s32.totalorder %s13, 1
      %p107 = por %p105, %p106
      %p108 = scmp.ne.s32.totalorder %s100, %s103
      %p109 = scmp.eq.s32.totalorder %s13, 0
      %p110 = por %p108, %p109
      %p111 = scmp.ne.s32.totalorder %s100, %s103
      %p112 = scmp.eq.s32.totalorder %s18, 1
      %p113 = por %p111, %p112
      %p114 = scmp.ne.s32.totalorder %s103, %s104
      %p115 = scmp.eq.s32.totalorder %s18, 0
      %p116 = por %p114, %p115
      %p117 = scmp.ne.s32.totalorder %s103, %s104
      %p118 = scmp.eq.s32.totalorder %s19, 1
      %p119 = por %p117, %p118
      %p121 = scmp.ne.s32.totalorder %s104, %s120
      %p122 = scmp.eq.s32.totalorder %s19, 0
      %p123 = por %p121, %p122
      %s124 = ssub.s32 %s20, %s39
      %s125 = ssub.s32 %s22, %s31
      %s126 = sor.u32 %s124, %s125
      %p127 = scmp.eq.s32.totalorder %s126, 0
      %s129 = sadd.s32 %s128, 1
      %s130 = scalar_select %p127, %s128, %s129
      %p133 = pneg %p127
      %p134 = scmp.eq.s32.totalorder %s13, 1
      %p135 = por %p133, %p134
      %p136 = scmp.ne.s32.totalorder %s128, %s131
      %p137 = scmp.eq.s32.totalorder %s13, 0
      %p138 = por %p136, %p137
      %p139 = scmp.ne.s32.totalorder %s128, %s131
      %p140 = scmp.eq.s32.totalorder %s18, 1
      %p141 = por %p139, %p140
      %p142 = scmp.ne.s32.totalorder %s131, %s132
      %p143 = scmp.eq.s32.totalorder %s18, 0
      %p144 = por %p142, %p143
      %p145 = scmp.ne.s32.totalorder %s131, %s132
      %p146 = scmp.eq.s32.totalorder %s19, 1
      %p147 = por %p145, %p146
      %p149 = scmp.ne.s32.totalorder %s132, %s148
      %p150 = scmp.eq.s32.totalorder %s19, 0
      %p151 = por %p149, %p150
      %s152 = ssub.s32 %s20, %s39
      %s153 = ssub.s32 %s21, %s35
      %s154 = sor.u32 %s152, %s153
      %p155 = scmp.eq.s32.totalorder %s154, 0
      %s157 = sadd.s32 %s156, 1
      %s158 = scalar_select %p155, %s156, %s157
      %p161 = pneg %p155
      %p162 = scmp.eq.s32.totalorder %s13, 1
      %p163 = por %p161, %p162
      %p164 = scmp.ne.s32.totalorder %s156, %s159
      %p165 = scmp.eq.s32.totalorder %s13, 0
      %p166 = por %p164, %p165
      %p167 = scmp.ne.s32.totalorder %s156, %s159
      %p168 = scmp.eq.s32.totalorder %s18, 1
      %p169 = por %p167, %p168
      %p170 = scmp.ne.s32.totalorder %s159, %s160
      %p171 = scmp.eq.s32.totalorder %s18, 0
      %p172 = por %p170, %p171
      %p173 = scmp.ne.s32.totalorder %s159, %s160
      %p174 = scmp.eq.s32.totalorder %s19, 1
      %p175 = por %p173, %p174
      %p177 = scmp.ne.s32.totalorder %s160, %s176
      %p178 = scmp.eq.s32.totalorder %s19, 0
      %p179 = por %p177, %p178
      %p180 = scmp.le.s32.totalorder 1, %s13
      %p181 = scmp.lt.s32.totalorder %s13, 3
      %p182 = pnand %p180, %p181
      %p183 = pneg %p182
      // Predicated region
      $region9: #{tpu_custom_call.1} parent=5 // pred_check
        _
      $region10: #{tpu_custom_call.1} parent=5 // pred_check_branch
        %185 = sbr.rel (%p182) target = $region12
      $region11: #{tpu_custom_call.1} parent=5 // pred_region
        %s186 = ssub.s32 %s13, 1
      $region12: #{tpu_custom_call.1} parent=5 // pred_fallthru
        _
      %p187 = scmp.lt.s32.totalorder %s13, 2
      // Predicated region
      $region13: #{tpu_custom_call.1} parent=5 // pred_check
        %p188 = pneg %p187
      $region14: #{tpu_custom_call.1} parent=5 // pred_check_branch
        %190 = sbr.rel (%p188) target = $region16
      $region15: #{tpu_custom_call.1} parent=5 // pred_region
        // Predicated region
        $region17: #{tpu_custom_call.1} parent=15 // pred_check
          %p191 = pneg %p54
        $region18: #{tpu_custom_call.1} parent=15 // pred_check_branch
          %193 = sbr.rel (%p191) target = $region20
        $region19: #{tpu_custom_call.1} parent=15 // pred_region
          %p194 = scmp.lt.s32.totalorder %s20, 1
          %s195 = scalar_select %p194, %s20, 1
          %p196 = scmp.lt.s32.totalorder %s21, 15
          %s197 = scalar_select %p196, %s21, 15
          %s198 = smul.addr %s195, 16
          %s199 = sadd.s32 %s197, %s198
          %s200 = smul.addr %s199, 8
          %s201 = scalar_lea.vmem %s0, %s200
        $region20: #{tpu_custom_call.1} parent=15 // pred_fallthru
          _
        // Predicated region
        $region21: #{tpu_custom_call.1} parent=15 // pred_check
          %p202 = pneg %p82
        $region22: #{tpu_custom_call.1} parent=15 // pred_check_branch
          %204 = sbr.rel (%p202) target = $region24
        $region23: #{tpu_custom_call.1} parent=15 // pred_region
          %p205 = scmp.lt.s32.totalorder %s20, 1
          %s206 = scalar_select %p205, %s20, 1
          %p207 = scmp.lt.s32.totalorder %s22, 0
          %s208 = scalar_select %p207, %s22, 0
          %s209 = sadd.s32 %s208, %s206
          %s210 = scalar_lea.vmem %s1, %s209
        $region24: #{tpu_custom_call.1} parent=15 // pred_fallthru
          _
        // Predicated region
        $region25: #{tpu_custom_call.1} parent=15 // pred_check
          %p211 = pneg %p110
        $region26: #{tpu_custom_call.1} parent=15 // pred_check_branch
          %213 = sbr.rel (%p211) target = $region28
        $region27: #{tpu_custom_call.1} parent=15 // pred_region
          %p214 = scmp.lt.s32.totalorder %s20, 1
          %s215 = scalar_select %p214, %s20, 1
          %p216 = scmp.lt.s32.totalorder %s21, 15
          %s217 = scalar_select %p216, %s21, 15
          %s218 = smul.addr %s215, 16
          %s219 = sadd.s32 %s217, %s218
          %s220 = smul.addr %s219, 8
          %s221 = scalar_lea.vmem %s2, %s220
        $region28: #{tpu_custom_call.1} parent=15 // pred_fallthru
          _
        // Predicated region
        $region29: #{tpu_custom_call.1} parent=15 // pred_check
          %p222 = pneg %p138
        $region30: #{tpu_custom_call.1} parent=15 // pred_check_branch
          %224 = sbr.rel (%p222) target = $region32
        $region31: #{tpu_custom_call.1} parent=15 // pred_region
          %p225 = scmp.lt.s32.totalorder %s20, 1
          %s226 = scalar_select %p225, %s20, 1
          %p227 = scmp.lt.s32.totalorder %s22, 0
          %s228 = scalar_select %p227, %s22, 0
          %s229 = sadd.s32 %s228, %s226
          %s230 = scalar_lea.vmem %s3, %s229
        $region32: #{tpu_custom_call.1} parent=15 // pred_fallthru
          _
      $region16: #{tpu_custom_call.1} parent=5 // pred_fallthru
        _
      %p231 = scmp.le.s32.totalorder 1, %s13
      %p232 = scmp.lt.s32.totalorder %s13, 3
      %p233 = pnand %p231, %p232
      %p234 = pneg %p233
      // Predicated region
      $region33: #{tpu_custom_call.1} parent=5 // pred_check
        _
      $region34: #{tpu_custom_call.1} parent=5 // pred_check_branch
        %236 = sbr.rel (%p233) target = $region36
      $region35: #{tpu_custom_call.1} parent=5 // pred_region
        %s237 = ssub.s32 %s13, 1
        %p238 = scmp.lt.s32.totalorder %s23, 1
        %s239 = scalar_select %p238, %s23, 1
        %p240 = scmp.lt.s32.totalorder %s24, 15
        %s241 = scalar_select %p240, %s24, 15
        %s242 = smul.addr %s239, 16
        %s243 = sadd.s32 %s241, %s242
        %s244 = smul.addr %s243, 8
        %s245 = scalar_lea.vmem %s0, %s244
        %p246 = pneg %p60
        %p247 = pneg %p57
        %p248 = scmp.lt.s32.totalorder %s23, 1
        %s249 = scalar_select %p248, %s23, 1
        %p250 = scmp.lt.s32.totalorder %s25, 0
        %s251 = scalar_select %p250, %s25, 0
        %s252 = sadd.s32 %s251, %s249
        %s253 = scalar_lea.vmem %s1, %s252
        %p254 = pneg %p88
        %p255 = pneg %p85
        %p256 = scmp.lt.s32.totalorder %s23, 1
        %s257 = scalar_select %p256, %s23, 1
        %p258 = scmp.lt.s32.totalorder %s24, 15
        %s259 = scalar_select %p258, %s24, 15
        %s260 = smul.addr %s257, 16
        %s261 = sadd.s32 %s259, %s260
        %s262 = smul.addr %s261, 8
        %s263 = scalar_lea.vmem %s2, %s262
        %p264 = pneg %p116
        %p265 = pneg %p113
        %p266 = scmp.lt.s32.totalorder %s23, 1
        %s267 = scalar_select %p266, %s23, 1
        %p268 = scmp.lt.s32.totalorder %s25, 0
        %s269 = scalar_select %p268, %s25, 0
        %s270 = sadd.s32 %s269, %s267
        %s271 = scalar_lea.vmem %s3, %s270
        %p272 = pneg %p144
        %p273 = pneg %p141
        %p274 = pneg %p172
        %p275 = pneg %p169
        %s276 = sand.u32 %s159, 1
        %s277 = scalar_lea.sflag [#allocation3], %s276
        %s278 = sand.u32 %s159, 1
        %s279 = smul.addr %s278, 8
        %s280 = scalar_lea.vmem [#allocation2], %s279
        %p281 = scmp.lt.s32.totalorder %s23, 1
        %s282 = scalar_select %p281, %s23, 1
        %p283 = scmp.lt.s32.totalorder %s24, 15
        %s284 = scalar_select %p283, %s24, 15
        %s285 = smul.addr %s282, 16
        %s286 = sadd.s32 %s284, %s285
        %s287 = smul.addr %s286, 8
        %s288 = scalar_lea.vmem %s0, %s287
        %p289 = scmp.lt.s32.totalorder %s23, 1
        %s290 = scalar_select %p289, %s23, 1
        %p291 = scmp.lt.s32.totalorder %s25, 0
        %s292 = scalar_select %p291, %s25, 0
        %s293 = sadd.s32 %s292, %s290
        %s294 = scalar_lea.vmem %s1, %s293
        %p295 = scmp.lt.s32.totalorder %s23, 1
        %s296 = scalar_select %p295, %s23, 1
        %p297 = scmp.lt.s32.totalorder %s24, 15
        %s298 = scalar_select %p297, %s24, 15
        %s299 = smul.addr %s296, 16
        %s300 = sadd.s32 %s298, %s299
        %s301 = smul.addr %s300, 8
        %s302 = scalar_lea.vmem %s2, %s301
        %p303 = scmp.lt.s32.totalorder %s23, 1
        %s304 = scalar_select %p303, %s23, 1
        %p305 = scmp.lt.s32.totalorder %s25, 0
        %s306 = scalar_select %p305, %s25, 0
        %s307 = sadd.s32 %s306, %s304
        %s308 = scalar_lea.vmem %s3, %s307
        %p309 = scmp.eq.s32.totalorder %s25, 0
        // Predicated region
        $region37: #{tpu_custom_call.1} parent=35 // pred_check
          %p310 = pneg %p309
        $region38: #{tpu_custom_call.1} parent=35 // pred_check_branch
          %312 = sbr.rel (%p310) target = $region40
        $region39: #{tpu_custom_call.1} parent=35 // pred_region
          %313 = vst [vmem:[%s280] sm:$0xff] 0.0
        $region40: #{tpu_custom_call.1} parent=35 // pred_fallthru
          _
        %v314 = vld [vmem:[%s288] sm:$0xff]
        %v315 = vld [vmem:[%s294] sm:$0x1]
        %v316 = vld [vmem:[%s302] sm:$0xff]
        %v317 = vld [vmem:[%s308] sm:$0x1]
        %319 = vset.pattern.permute.xlu0 0
        %320 = vperm.xlu0 %319, %v316
        %v321 = vpop.permute.xlu0 %320
        %v324 = vlaneseq
        %v325 = vshrl.u32 %v324, 7
        %v326 = vsub.s32 0, %v325
        %v327 = vrot.slane %v317, %v326
        %v329 = vsub.f32 %v321, %v327
        %vm330 = vweird.f32 %v329
        %vm331 = vmxor %vm330, 1
        %vm332 = vcmp.gt.f32.partialorder %v329, 0.0
        %vm333 = vmand %vm331, %vm332
        %v335 = vlaneseq
        %v336 = vshrl.u32 %v335, 7
        %v337 = vsub.s32 0, %v336
        %v338 = vrot.slane %v315, %v337
        %341 = vset.pattern.permute.xlu0 0
        %342 = vperm.xlu0 %341, %v314
        %v343 = vpop.permute.xlu0 %342
        %v345 = vsub.f32 %v338, %v343
        %v346 = vmul.f32 %v345, 1.442695
        %v347 = vpow.pop %v346
        %v348 = vadd.f32 %v347, 1.0
        %v349 = vlog2.pop %v348
        %v350 = vmul.f32 %v349, 0.6931472
        %v351 = vmul.f32 %v350, -1.442695
        %v352 = vmax.f32 %v351, -33.21928
        %v353 = vsel %vm333, %v352, 0.0
        %v354 = vld [vmem:[%s280] sm:$0xff]
        %v355 = vadd.f32 %v353, 0.0
        %v356 = vadd.f32 %v354, %v355
        %357 = vst [vmem:[%s280] sm:$0xff] %v356
        %s358 = sand.u32 %s159, 1
        %s359 = scalar_lea.sflag [#allocation3], %s358
        %s360 = sand.u32 %s159, 1
        %s361 = smul.addr %s360, 8
        %s362 = scalar_lea.vmem [#allocation2], %s361
        // Predicated region
        $region41: #{tpu_custom_call.1} parent=35 // pred_check
          %p363 = pneg %p169
        $region42: #{tpu_custom_call.1} parent=35 // pred_check_branch
          %365 = sbr.rel (%p363) target = $region44
        $region43: #{tpu_custom_call.1} parent=35 // pred_region
          %s367 = ssub.s32 128, 128
          %368 = vsyncadd %s359, %s367
          %s369 = sadd.s32 %s24, %s23
          %s370 = smul.addr %s369, 128
          %s371 = scalar_lea.hbm %s4, %s370
          %s373 = sshll.u32 %s362, 4
          %s374 = int_to_ptr.vmem [resolvable:$true] %s373
          %376 = dma.vmem_to_hbm [thread:$0]  %s374, 128, %s371, %s359
        $region44: #{tpu_custom_call.1} parent=35 // pred_fallthru
          _
      $region36: #{tpu_custom_call.1} parent=5 // pred_fallthru
        _
      %p377 = scmp.le.s32.totalorder 2, %s13
      // Predicated region
      $region45: #{tpu_custom_call.1} parent=5 // pred_check
        %p378 = pneg %p377
      $region46: #{tpu_custom_call.1} parent=5 // pred_check_branch
        %380 = sbr.rel (%p378) target = $region48
      $region47: #{tpu_custom_call.1} parent=5 // pred_region
        %s381 = ssub.s32 %s13, 2
        // Predicated region
        $region49: #{tpu_custom_call.1} parent=47 // pred_check
          %p382 = pneg %p175
        $region50: #{tpu_custom_call.1} parent=47 // pred_check_branch
          %384 = sbr.rel (%p382) target = $region52
        $region51: #{tpu_custom_call.1} parent=47 // pred_region
          %s385 = sand.u32 %s160, 1
          %s386 = scalar_lea.sflag [#allocation3], %s385
          %s387 = sand.u32 %s160, 1
          %s388 = smul.addr %s387, 8
          %s389 = scalar_lea.vmem [#allocation2], %s388
          %390 = dma.done %s386, 128
        $region52: #{tpu_custom_call.1} parent=47 // pred_fallthru
          _
      $region48: #{tpu_custom_call.1} parent=5 // pred_fallthru
        _
    $region6: #{tpu_custom_call.1} parent=1 // loop_footer
      %s17 = sadd.s32 1, %s13
    $region7: #{tpu_custom_call.1} parent=1 // loop_footer_branch
      %12 = sbr.rel target = $region3
    $region8: #{tpu_custom_call.1} parent=1 // loop_exit
      _
    %391 = vsyncpa [#allocation3], 1
    %s392 = scalar_lea.sflag [#allocation3], 1
    %393 = vsyncpa %s392, 1

</llo_original>
